<compile_context>
chip_gen: v6e
topology: v6e:2x2x1
jax: 0.10.0
libtpu: 0.0.40
codegen_flags: <defaults>
</compile_context>

<pallas_src>
import functools
import math

import numpy as np

import jax
import jax.numpy as jnp
from jax.experimental import pallas as pl
from jax.experimental.pallas import tpu as pltpu


# --------------------------------------------------------------------------
# Kernels
# --------------------------------------------------------------------------

def _upscale_matmul_kernel(x_ref, r_ref, o_ref, *, gain, n_terms):
    """x_ref: (tr, Lin), r_ref: (Lin, Lout) one-hot bf16, o_ref: (tr, Lout).

    Lin = k*W input lanes per stripe; Lout = Lin*F^2 output lanes per stripe.
    Each output column has exactly one 1.0 in R, so the matmul is a pure copy.
    """
    x = x_ref[...]
    if gain != 1:
        # Apply gain in the input dtype (matches PyTorch rounding).
        x = x * jnp.asarray(gain, dtype=x.dtype)

    r = r_ref[...]
    xf = x.astype(jnp.float32)

    # Exact bf16 decomposition of xf: xf == sum(terms) bit-exactly
    # (3 terms cover the 24-bit f32 significand; 1 term for bf16, 2 for f16).
    terms = []
    rem = xf
    for i in range(n_terms):
        t = rem.astype(jnp.bfloat16)
        terms.append(t)
        if i + 1 < n_terms:
            rem = rem - t.astype(jnp.float32)

    # Each dot product contributes exactly one exact bf16*1.0 term per column;
    # the f32 accumulation hi + mid + lo reconstructs xf exactly.
    acc = jnp.dot(terms[0], r, preferred_element_type=jnp.float32)
    for t in terms[1:]:
        acc = acc + jnp.dot(t, r, preferred_element_type=jnp.float32)

    # Single dense, unmasked, lane-dense store of the whole block.
    o_ref[...] = acc.astype(o_ref.dtype)


def _gain_kernel(x_ref, o_ref, *, gain):
    # gain-only path (factor <= 1, gain != 1): elementwise multiply in the
    # input dtype over lane-dense (tr, k*W) blocks.
    o_ref[...] = x_ref[...] * jnp.asarray(gain, dtype=x_ref.dtype)


# --------------------------------------------------------------------------
# Wrapper
# --------------------------------------------------------------------------

def _fold_rows(rows, w):
    """How many flattened N*C*H rows to fold into one VMEM row so the input
    lane width k*w reaches ~128 (k must divide rows)."""
    desired = max(1, 128 // max(w, 1))
    return math.gcd(rows, desired)


def _round_up(a, b):
    return -(-a // b) * b


def _pick_row_block(s, row_bytes, target_bytes):
    """Fixed 8-aligned row block targeting `target_bytes` of output per block;
    grid uses cdiv so it need not divide s."""
    tr = max(8, (target_bytes // max(row_bytes, 1)) // 8 * 8)
    return min(tr, _round_up(s, 8))


_COMPILER_PARAMS = pltpu.CompilerParams(
    dimension_semantics=("parallel",),          # megacore sharding on v7x
    vmem_limit_bytes=32 * 1024 * 1024,          # <= v7x scoped default; safe on all gens
)


def upscale2d(x, factor: int = 2, gain: float = 1.0, *,
              target_block_bytes: int = 4 * 1024 * 1024):
    """Pallas TPU implementation of StyleGAN Upscale2d.  x is NCHW."""
    N, C, H, W = x.shape
    F = int(factor)

    # Trivial identity: no kernel, no HBM pass.
    if F <= 1 and gain == 1:
        return x

    rows = N * C * H
    itemsize = jnp.dtype(x.dtype).itemsize
    k = _fold_rows(rows, W)
    S = rows // k
    Lin = k * W
    xf = x.reshape(S, Lin)          # free: contiguous row-major view

    if F <= 1:
        tr = _pick_row_block(S, Lin * itemsize, target_block_bytes)
        out = pl.pallas_call(
            functools.partial(_gain_kernel, gain=gain),
            out_shape=jax.ShapeDtypeStruct((S, Lin), x.dtype),
            grid=(pl.cdiv(S, tr),),
            in_specs=[pl.BlockSpec((tr, Lin), lambda i: (i, 0))],
            out_specs=pl.BlockSpec((tr, Lin), lambda i: (i, 0)),
            compiler_params=_COMPILER_PARAMS,
        )(xf)
        return out.reshape(N, C, H, W)

    Wo = W * F
    Lout = Lin * F * F

    # One-hot replication matrix (Lin, Lout), bf16 (1.0 is exact in bf16).
    # Output lane j within a stripe decodes as (r_local, fh, w, fw); its single
    # source is input lane r_local*W + w.
    cols = np.arange(Lout)
    src = (cols // (F * Wo)) * W + (cols % Wo) // F
    r_np = np.zeros((Lin, Lout), dtype=np.float32)
    r_np[src, cols] = 1.0
    R = jnp.asarray(r_np, dtype=jnp.bfloat16)

    tr = _pick_row_block(S, Lout * itemsize, target_block_bytes)

    if x.dtype == jnp.bfloat16:
        n_terms = 1
    elif x.dtype == jnp.float16:
        n_terms = 2
    else:
        n_terms = 3     # float32 (default)

    out = pl.pallas_call(
        functools.partial(_upscale_matmul_kernel, gain=gain, n_terms=n_terms),
        out_shape=jax.ShapeDtypeStruct((S, Lout), x.dtype),
        grid=(pl.cdiv(S, tr),),
        in_specs=[
            pl.BlockSpec((tr, Lin), lambda i: (i, 0)),
            pl.BlockSpec((Lin, Lout), lambda i: (0, 0)),   # R: fetched once, resident
        ],
        out_specs=pl.BlockSpec((tr, Lout), lambda i: (i, 0)),
        compiler_params=_COMPILER_PARAMS,
    )(xf, R)

    # (S, Lout) is the contiguous row-major view of (N, C, H*F, W*F): free reshape.
    return out.reshape(N, C, H * F, W * F)


# --------------------------------------------------------------------------
# Reference & self-test
# --------------------------------------------------------------------------

def _reference_upscale2d(x, factor=2, gain=1.0):
    if gain != 1:
        x = x * jnp.asarray(gain, dtype=x.dtype)
    if factor > 1:
        x = jnp.repeat(jnp.repeat(x, factor, axis=2), factor, axis=3)
    return x


if __name__ == "__main__":
    key = jax.random.PRNGKey(0)
    # Small NCHW input consistent with the module's forward (Upscale2d path).
    x = jax.random.normal(key, (2, 4, 16, 16), dtype=jnp.float32)

    # Main path: factor=2, gain=1 (as used inside G_synthesis GBlocks).
    y = jax.block_until_ready(upscale2d(x, factor=2, gain=1.0))
    y_ref = _reference_upscale2d(x, factor=2, gain=1.0)
    assert y.shape == (2, 4, 32, 32), y.shape
    assert y.dtype == x.dtype, y.dtype
    assert jnp.array_equal(y, y_ref), "mismatch vs reference (factor=2, gain=1)"

    # Gain + upscale path (gain applied in input dtype, then exact copy).
    y2 = jax.block_until_ready(upscale2d(x, factor=2, gain=2.0))
    assert jnp.array_equal(y2, _reference_upscale2d(x, factor=2, gain=2.0)), \
        "mismatch vs reference (factor=2, gain=2)"

    # bf16 path (single native bf16 pass).
    x_bf = x.astype(jnp.bfloat16)
    y_bf = jax.block_until_ready(upscale2d(x_bf, factor=2, gain=1.0))
    assert y_bf.dtype == jnp.bfloat16
    assert jnp.array_equal(y_bf, _reference_upscale2d(x_bf, factor=2, gain=1.0)), \
        "mismatch vs reference (bf16)"

    # Ragged-tail path: small block target forces a cdiv grid with a partial
    # final block (S=20 rows, tr=8 -> 3 blocks).
    x3 = jax.random.normal(jax.random.PRNGKey(1), (2, 5, 16, 16), dtype=jnp.float32)
    y3 = jax.block_until_ready(
        upscale2d(x3, factor=2, gain=1.0, target_block_bytes=16 * 1024))
    assert jnp.array_equal(y3, _reference_upscale2d(x3, factor=2, gain=1.0)), \
        "mismatch vs reference (ragged tail)"

    # Gain-only path.
    y4 = jax.block_until_ready(upscale2d(x, factor=1, gain=0.5))
    assert jnp.array_equal(y4, _reference_upscale2d(x, factor=1, gain=0.5)), \
        "mismatch vs reference (factor=1, gain=0.5)"

    # Identity short-circuit.
    y5 = upscale2d(x, factor=1, gain=1.0)
    assert y5 is x

    print("KERNEL_OK")
</pallas_src>

<mosaic_0001>
module attributes {stable_mosaic.version = 11 : i64} {
  func.func @_upscale_matmul_kernel(%arg0: i32, %arg1: memref<16x128xf32, #tpu.memory_space<vmem>>, %arg2: memref<128x512xbf16, #tpu.memory_space<vmem>>, %arg3: memref<16x512xf32, #tpu.memory_space<vmem>>) attributes {dimension_semantics = [#tpu.dimension_semantics<parallel>], iteration_bounds = array<i64: 1>, scalar_prefetch = 0 : i64, scratch_operands = 0 : i64, tpu.core_type = #tpu.core_type<tc>, window_params = [{transform_indices = @transform_0, window_bounds = array<i64: 16, 128>}, {pipeline_mode = #tpu.pipeline_mode<synchronous>, transform_indices = @transform_1, window_bounds = array<i64: 128, 512>}, {transform_indices = @transform_2, window_bounds = array<i64: 16, 512>}]} {
    %c0 = arith.constant 0 : index
    %c0_0 = arith.constant 0 : index
    %0 = vector.load %arg1[%c0, %c0_0] : memref<16x128xf32, #tpu.memory_space<vmem>>, vector<16x128xf32>
    %c0_1 = arith.constant 0 : index
    %c0_2 = arith.constant 0 : index
    %1 = vector.load %arg2[%c0_1, %c0_2] : memref<128x512xbf16, #tpu.memory_space<vmem>>, vector<128x512xbf16>
    %2 = arith.truncf %0 : vector<16x128xf32> to vector<16x128xbf16>
    %3 = arith.extf %2 : vector<16x128xbf16> to vector<16x128xf32>
    %4 = arith.subf %0, %3 : vector<16x128xf32>
    %5 = arith.truncf %4 : vector<16x128xf32> to vector<16x128xbf16>
    %6 = arith.extf %5 : vector<16x128xbf16> to vector<16x128xf32>
    %7 = arith.subf %4, %6 : vector<16x128xf32>
    %8 = arith.truncf %7 : vector<16x128xf32> to vector<16x128xbf16>
    %cst = arith.constant dense<0.000000e+00> : vector<16x512xf32>
    %9 = tpu.matmul %2, %1, %cst {dimension_numbers = #tpu.dot_dimension_numbers<[1], [0], [0], [1], [0, 0, 1, 1], [], []>} : vector<16x128xbf16>, vector<128x512xbf16>, vector<16x512xf32> -> vector<16x512xf32>
    %cst_3 = arith.constant dense<0.000000e+00> : vector<16x512xf32>
    %10 = tpu.matmul %5, %1, %cst_3 {dimension_numbers = #tpu.dot_dimension_numbers<[1], [0], [0], [1], [0, 0, 1, 1], [], []>} : vector<16x128xbf16>, vector<128x512xbf16>, vector<16x512xf32> -> vector<16x512xf32>
    %11 = arith.addf %9, %10 : vector<16x512xf32>
    %cst_4 = arith.constant dense<0.000000e+00> : vector<16x512xf32>
    %12 = tpu.matmul %8, %1, %cst_4 {dimension_numbers = #tpu.dot_dimension_numbers<[1], [0], [0], [1], [0, 0, 1, 1], [], []>} : vector<16x128xbf16>, vector<128x512xbf16>, vector<16x512xf32> -> vector<16x512xf32>
    %13 = arith.addf %11, %12 : vector<16x512xf32>
    %c0_5 = arith.constant 0 : index
    %c0_6 = arith.constant 0 : index
    %14 = vector.load %arg3[%c0_5, %c0_6] : memref<16x512xf32, #tpu.memory_space<vmem>>, vector<16x512xf32>
    tpu.vector_store %arg3[%c0_5, %c0_6], %13 {strides = array<i32>} : memref<16x512xf32, #tpu.memory_space<vmem>>, vector<16x512xf32>,
    return
  }
  func.func @transform_0(%arg0: i32) -> (i32, i32) {
    %c0_i32 = arith.constant 0 : i32
    %c0_i32_0 = arith.constant 0 : i32
    return %arg0, %c0_i32 : i32, i32
  }
  func.func @transform_1(%arg0: i32) -> (i32, i32) {
    %c0_i32 = arith.constant 0 : i32
    %c0_i32_0 = arith.constant 0 : i32
    %c0_i32_1 = arith.constant 0 : i32
    return %c0_i32, %c0_i32_0 : i32, i32
  }
  func.func @transform_2(%arg0: i32) -> (i32, i32) {
    %c0_i32 = arith.constant 0 : i32
    %c0_i32_0 = arith.constant 0 : i32
    return %arg0, %c0_i32 : i32, i32
  }
}

</mosaic_0001>

<llo_original>
// kernel: tpu_custom_call.1
$region0: #{tpu_custom_call.1}
  #allocation0 [shape = 'u32[]', space=smem, size = 0x4, offset = 0x4, fixed_abs, tag = 'smem constant byte address 0x4 - core index']
  #allocation1 [shape = 'u32[144,128]{1,0:T(1,128)}', space=vmem, size = 0x12000, scoped, tag = 'internal scratch']
  %s0 = inlined_call_operand.hbm [shape: f32[16,128], index: 0, kind: input, shape index: {}]
  %s1 = inlined_call_operand.hbm [shape: bf16[128,512], index: 1, kind: input, shape index: {}]
  %s2 = inlined_call_operand.hbm [shape: f32[16,512], index: 2, kind: output, shape index: {}]
  %s3 = sld [smem:[#allocation0]]
  $region26: #{tpu_custom_call.1} parent=0
    _
  %s5 = ssub.s32 1, %s3
  %s6 = scalar_select 0, %s5, %s3
  $region1: #{tpu_custom_call.1} parent=0
    #allocation2 [shape = 'u8[8192]{0}', space=vmem, size = 0x2000, scoped, tag = 'input window, operand 0, single buffered']
    #allocation3 [shape = 's32[1]{0}', space=sflag, size = 0x4, scoped, tag = 'scoped memory for tpu_custom_call.1']
    #allocation4 [shape = 's32[1]{0}', space=sflag, size = 0x4, scoped, tag = 'scoped memory for tpu_custom_call.1']
    #allocation5 [shape = 'u8[131072]{0}', space=vmem, size = 0x20000, scoped, tag = 'input window, operand 1, single buffered']
    #allocation6 [shape = 's32[1]{0}', space=sflag, size = 0x4, scoped, tag = 'scoped memory for tpu_custom_call.1']
    #allocation7 [shape = 'u8[32768]{0}', space=vmem, size = 0x8000, scoped, tag = 'output window, operand 0, single buffered']
    %7 = vsyncpa [#allocation3], 0
    %8 = vsyncpa [#allocation6], 0
    %9 = vsyncpa [#allocation4], 0
    // Predicated region
    $region2: #{tpu_custom_call.1} parent=1 // pred_check
      _
    $region3: #{tpu_custom_call.1} parent=1 // pred_check_branch
      %11 = sbr.rel (0) target = $region5
    $region4: #{tpu_custom_call.1} parent=1 // pred_region
      %s13 = ssub.s32 256, 256
      %14 = vsyncadd [#allocation3], %s13
      %s15 = sshll.u32 [#allocation2], 4
      %s16 = int_to_ptr.vmem [resolvable:$true] %s15
      %21 = dma.hbm_to_vmem [thread:$0]  %s0, 256, %s16, [#allocation3], 128, 128, 8
    $region5: #{tpu_custom_call.1} parent=1 // pred_fallthru
      _
    // Predicated region
    $region6: #{tpu_custom_call.1} parent=1 // pred_check
      _
    $region7: #{tpu_custom_call.1} parent=1 // pred_check_branch
      %23 = sbr.rel (0) target = $region9
    $region8: #{tpu_custom_call.1} parent=1 // pred_region
      %s25 = ssub.s32 4096, 4096
      %26 = vsyncadd [#allocation6], %s25
      %s27 = sshll.u32 [#allocation5], 4
      %s28 = int_to_ptr.vmem [resolvable:$true] %s27
      %33 = dma.hbm_to_vmem [thread:$0]  %s1, 4096, %s28, [#allocation6], 256, 256, 16
    $region9: #{tpu_custom_call.1} parent=1 // pred_fallthru
      _
    // Predicated region
    $region10: #{tpu_custom_call.1} parent=1 // pred_check
      _
    $region11: #{tpu_custom_call.1} parent=1 // pred_check_branch
      %35 = sbr.rel (0) target = $region13
    $region12: #{tpu_custom_call.1} parent=1 // pred_region
      %36 = dma.done [#allocation3], 256
    $region13: #{tpu_custom_call.1} parent=1 // pred_fallthru
      _
    // Predicated region
    $region14: #{tpu_custom_call.1} parent=1 // pred_check
      _
    $region15: #{tpu_custom_call.1} parent=1 // pred_check_branch
      %38 = sbr.rel (0) target = $region17
    $region16: #{tpu_custom_call.1} parent=1 // pred_region
      %39 = dma.done [#allocation6], 4096
    $region17: #{tpu_custom_call.1} parent=1 // pred_fallthru
      _
    %v41 = vld [vmem:[#allocation2] sm:$0xff]
    %v42 = vld [vmem:[#allocation2 + $0x8] sm:$0xff]
    %v43 = vld [vmem:[#allocation5] sm:$0xff]
    %v44 = vld [vmem:[#allocation5 + $0x8] sm:$0xff]
    %v45 = vld [vmem:[#allocation5 + $0x10] sm:$0xff]
    %v46 = vld [vmem:[#allocation5 + $0x18] sm:$0xff]
    %v47 = vld [vmem:[#allocation5 + $0x20] sm:$0xff]
    %v48 = vld [vmem:[#allocation5 + $0x28] sm:$0xff]
    %v49 = vld [vmem:[#allocation5 + $0x30] sm:$0xff]
    %v50 = vld [vmem:[#allocation5 + $0x38] sm:$0xff]
    %v51 = vld [vmem:[#allocation5 + $0x40] sm:$0xff]
    %v52 = vld [vmem:[#allocation5 + $0x48] sm:$0xff]
    %v53 = vld [vmem:[#allocation5 + $0x50] sm:$0xff]
    %v54 = vld [vmem:[#allocation5 + $0x58] sm:$0xff]
    %v55 = vld [vmem:[#allocation5 + $0x60] sm:$0xff]
    %v56 = vld [vmem:[#allocation5 + $0x68] sm:$0xff]
    %v57 = vld [vmem:[#allocation5 + $0x70] sm:$0xff]
    %v58 = vld [vmem:[#allocation5 + $0x78] sm:$0xff]
    %v59 = vld [vmem:[#allocation5 + $0x80] sm:$0xff]
    %v60 = vld [vmem:[#allocation5 + $0x88] sm:$0xff]
    %v61 = vld [vmem:[#allocation5 + $0x90] sm:$0xff]
    %v62 = vld [vmem:[#allocation5 + $0x98] sm:$0xff]
    %v63 = vld [vmem:[#allocation5 + $0xa0] sm:$0xff]
    %v64 = vld [vmem:[#allocation5 + $0xa8] sm:$0xff]
    %v65 = vld [vmem:[#allocation5 + $0xb0] sm:$0xff]
    %v66 = vld [vmem:[#allocation5 + $0xb8] sm:$0xff]
    %v67 = vld [vmem:[#allocation5 + $0xc0] sm:$0xff]
    %v68 = vld [vmem:[#allocation5 + $0xc8] sm:$0xff]
    %v69 = vld [vmem:[#allocation5 + $0xd0] sm:$0xff]
    %v70 = vld [vmem:[#allocation5 + $0xd8] sm:$0xff]
    %v71 = vld [vmem:[#allocation5 + $0xe0] sm:$0xff]
    %v72 = vld [vmem:[#allocation5 + $0xe8] sm:$0xff]
    %v73 = vld [vmem:[#allocation5 + $0xf0] sm:$0xff]
    %v74 = vld [vmem:[#allocation5 + $0xf8] sm:$0xff]
    %v75 = vpack.c.bf16 %v42, %v41
    %v76 = vunpack.c.l.bf16 %v75
    %v77 = vunpack.c.h.bf16 %v75
    %v78 = vsub.f32 %v41, %v76
    %v79 = vsub.f32 %v42, %v77
    %v80 = vpack.c.bf16 %v79, %v78
    %v81 = vunpack.c.l.bf16 %v80
    %v82 = vunpack.c.h.bf16 %v80
    %v83 = vsub.f32 %v78, %v81
    %v84 = vsub.f32 %v79, %v82
    %v85 = vpack.c.bf16 %v84, %v83
    %v118 = vunpack.c.l.b16 %v43
    %v119 = vunpack.c.h.b16 %v43
    %v120 = vunpack.c.l.b16 %v44
    %v121 = vunpack.c.h.b16 %v44
    %v122 = vunpack.c.l.b16 %v45
    %v123 = vunpack.c.h.b16 %v45
    %v124 = vunpack.c.l.b16 %v46
    %v125 = vunpack.c.h.b16 %v46
    %v126 = vunpack.c.l.b16 %v47
    %v127 = vunpack.c.h.b16 %v47
    %v128 = vunpack.c.l.b16 %v48
    %v129 = vunpack.c.h.b16 %v48
    %v130 = vunpack.c.l.b16 %v49
    %v131 = vunpack.c.h.b16 %v49
    %v132 = vunpack.c.l.b16 %v50
    %v133 = vunpack.c.h.b16 %v50
    %v134 = vunpack.c.l.b16 %v51
    %v135 = vunpack.c.h.b16 %v51
    %v136 = vunpack.c.l.b16 %v52
    %v137 = vunpack.c.h.b16 %v52
    %v138 = vunpack.c.l.b16 %v53
    %v139 = vunpack.c.h.b16 %v53
    %v140 = vunpack.c.l.b16 %v54
    %v141 = vunpack.c.h.b16 %v54
    %v142 = vunpack.c.l.b16 %v55
    %v143 = vunpack.c.h.b16 %v55
    %v144 = vunpack.c.l.b16 %v56
    %v145 = vunpack.c.h.b16 %v56
    %v146 = vunpack.c.l.b16 %v57
    %v147 = vunpack.c.h.b16 %v57
    %v148 = vunpack.c.l.b16 %v58
    %v149 = vunpack.c.h.b16 %v58
    %v150 = vunpack.c.l.b16 %v59
    %v151 = vunpack.c.h.b16 %v59
    %v152 = vunpack.c.l.b16 %v60
    %v153 = vunpack.c.h.b16 %v60
    %v154 = vunpack.c.l.b16 %v61
    %v155 = vunpack.c.h.b16 %v61
    %v156 = vunpack.c.l.b16 %v62
    %v157 = vunpack.c.h.b16 %v62
    %v158 = vunpack.c.l.b16 %v63
    %v159 = vunpack.c.h.b16 %v63
    %v160 = vunpack.c.l.b16 %v64
    %v161 = vunpack.c.h.b16 %v64
    %v162 = vunpack.c.l.b16 %v65
    %v163 = vunpack.c.h.b16 %v65
    %v164 = vunpack.c.l.b16 %v66
    %v165 = vunpack.c.h.b16 %v66
    %v166 = vunpack.c.l.b16 %v67
    %v167 = vunpack.c.h.b16 %v67
    %v168 = vunpack.c.l.b16 %v68
    %v169 = vunpack.c.h.b16 %v68
    %v170 = vunpack.c.l.b16 %v69
    %v171 = vunpack.c.h.b16 %v69
    %v172 = vunpack.c.l.b16 %v70
    %v173 = vunpack.c.h.b16 %v70
    %v174 = vunpack.c.l.b16 %v71
    %v175 = vunpack.c.h.b16 %v71
    %v176 = vunpack.c.l.b16 %v72
    %v177 = vunpack.c.h.b16 %v72
    %v178 = vunpack.c.l.b16 %v73
    %v179 = vunpack.c.h.b16 %v73
    %v180 = vunpack.c.l.b16 %v74
    %v181 = vunpack.c.h.b16 %v74
    %v182 = vpack.c.b16 %v122, %v118
    %v183 = vpack.c.b16 %v123, %v119
    %v184 = vpack.c.b16 %v124, %v120
    %v185 = vpack.c.b16 %v125, %v121
    %v186 = vpack.c.b16 %v130, %v126
    %v187 = vpack.c.b16 %v131, %v127
    %v188 = vpack.c.b16 %v132, %v128
    %v189 = vpack.c.b16 %v133, %v129
    %v190 = vpack.c.b16 %v138, %v134
    %v191 = vpack.c.b16 %v139, %v135
    %v192 = vpack.c.b16 %v140, %v136
    %v193 = vpack.c.b16 %v141, %v137
    %v194 = vpack.c.b16 %v146, %v142
    %v195 = vpack.c.b16 %v147, %v143
    %v196 = vpack.c.b16 %v148, %v144
    %v197 = vpack.c.b16 %v149, %v145
    %v198 = vpack.c.b16 %v154, %v150
    %v199 = vpack.c.b16 %v155, %v151
    %v200 = vpack.c.b16 %v156, %v152
    %v201 = vpack.c.b16 %v157, %v153
    %v202 = vpack.c.b16 %v162, %v158
    %v203 = vpack.c.b16 %v163, %v159
    %v204 = vpack.c.b16 %v164, %v160
    %v205 = vpack.c.b16 %v165, %v161
    %v206 = vpack.c.b16 %v170, %v166
    %v207 = vpack.c.b16 %v171, %v167
    %v208 = vpack.c.b16 %v172, %v168
    %v209 = vpack.c.b16 %v173, %v169
    %v210 = vpack.c.b16 %v178, %v174
    %v211 = vpack.c.b16 %v179, %v175
    %v212 = vpack.c.b16 %v180, %v176
    %v213 = vpack.c.b16 %v181, %v177
    %246 = vmatprep.subr.bf16.mxu0 %v211
    %247 = vmatpush1.bf16.msra.mxu0 %v210
    %248 = vmatprep.subr.bf16.mxu0 %v207
    %249 = vmatpush1.bf16.msra.mxu0 %v206
    %250 = vmatprep.subr.bf16.mxu0 %v203
    %251 = vmatpush1.bf16.msra.mxu0 %v202
    %252 = vmatprep.subr.bf16.mxu0 %v199
    %253 = vmatpush1.bf16.msra.mxu0 %v198
    %254 = vmatprep.subr.bf16.mxu0 %v195
    %255 = vmatpush1.bf16.msra.mxu0 %v194
    %256 = vmatprep.subr.bf16.mxu0 %v191
    %257 = vmatpush1.bf16.msra.mxu0 %v190
    %258 = vmatprep.subr.bf16.mxu0 %v187
    %259 = vmatpush1.bf16.msra.mxu0 %v186
    %260 = vmatprep.subr.bf16.mxu0 %v183
    %261 = vmatpush1.bf16.msra.mxu0 %v182
    %262 = vmatprep.subr.bf16.mxu0 0
    %263 = vmatpush2.bf16.msra.mxu0 0
    %264 = vmatprep.subr.bf16.mxu0 0
    %265 = vmatpush2.bf16.msra.mxu0 0
    %266 = vmatprep.subr.bf16.mxu0 0
    %267 = vmatpush2.bf16.msra.mxu0 0
    %268 = vmatprep.subr.bf16.mxu0 0
    %269 = vmatpush2.bf16.msra.mxu0 0
    %270 = vmatprep.subr.bf16.mxu0 0
    %271 = vmatpush2.bf16.msra.mxu0 0
    %272 = vmatprep.subr.bf16.mxu0 0
    %273 = vmatpush2.bf16.msra.mxu0 0
    %274 = vmatprep.subr.bf16.mxu0 0
    %275 = vmatpush2.bf16.msra.mxu0 0
    %276 = vmatprep.subr.bf16.mxu0 0
    %277 = vmatpush2.bf16.msra.mxu0 0
    %278 = vmatprep.mubr.bf16.mxu0 0
    %279 = vmatmul.mubr.bf16.gmra.mxu0 %v80
    %v280 = vpop.f32.mrf.mxu0
    %v281 = vadd.f32 0.0, %v280
    %v282 = vpop.f32.mrf.mxu0
    %v283 = vadd.f32 0.0, %v282
    %v284 = vpop.f32.mrf.mxu0
    %v285 = vadd.f32 0.0, %v284
    %v286 = vpop.f32.mrf.mxu0
    %v287 = vadd.f32 0.0, %v286
    %288 = vdwg.mxu0
    %289 = vmatprep.subr.bf16.mxu0 %v213
    %290 = vmatpush1.bf16.msra.mxu0 %v212
    %291 = vmatprep.subr.bf16.mxu0 %v209
    %292 = vmatpush1.bf16.msra.mxu0 %v208
    %293 = vmatprep.subr.bf16.mxu0 %v205
    %294 = vmatpush1.bf16.msra.mxu0 %v204
    %295 = vmatprep.subr.bf16.mxu0 %v201
    %296 = vmatpush1.bf16.msra.mxu0 %v200
    %297 = vmatprep.subr.bf16.mxu0 %v197
    %298 = vmatpush1.bf16.msra.mxu0 %v196
    %299 = vmatprep.subr.bf16.mxu0 %v193
    %300 = vmatpush1.bf16.msra.mxu0 %v192
    %301 = vmatprep.subr.bf16.mxu0 %v189
    %302 = vmatpush1.bf16.msra.mxu0 %v188
    %303 = vmatprep.subr.bf16.mxu0 %v185
    %304 = vmatpush1.bf16.msra.mxu0 %v184
    %305 = vmatprep.subr.bf16.mxu0 0
    %306 = vmatpush2.bf16.msra.mxu0 0
    %307 = vmatprep.subr.bf16.mxu0 0
    %308 = vmatpush2.bf16.msra.mxu0 0
    %309 = vmatprep.subr.bf16.mxu0 0
    %310 = vmatpush2.bf16.msra.mxu0 0
    %311 = vmatprep.subr.bf16.mxu0 0
    %312 = vmatpush2.bf16.msra.mxu0 0
    %313 = vmatprep.subr.bf16.mxu0 0
    %314 = vmatpush2.bf16.msra.mxu0 0
    %315 = vmatprep.subr.bf16.mxu0 0
    %316 = vmatpush2.bf16.msra.mxu0 0
    %317 = vmatprep.subr.bf16.mxu0 0
    %318 = vmatpush2.bf16.msra.mxu0 0
    %319 = vmatprep.subr.bf16.mxu0 0
    %320 = vmatpush2.bf16.msra.mxu0 0
    %321 = vmatprep.mubr.bf16.mxu0 0
    %322 = vmatmul.mubr.bf16.gmra.mxu0 %v80
    %v323 = vpop.f32.mrf.mxu0
    %v324 = vadd.f32 0.0, %v323
    %v325 = vpop.f32.mrf.mxu0
    %v326 = vadd.f32 0.0, %v325
    %v327 = vpop.f32.mrf.mxu0
    %v328 = vadd.f32 0.0, %v327
    %v329 = vpop.f32.mrf.mxu0
    %v330 = vadd.f32 0.0, %v329
    %331 = vdwg.mxu0
    %332 = vmatprep.subr.bf16.mxu0 %v211
    %333 = vmatpush1.bf16.msra.mxu0 %v210
    %334 = vmatprep.subr.bf16.mxu0 %v207
    %335 = vmatpush1.bf16.msra.mxu0 %v206
    %336 = vmatprep.subr.bf16.mxu0 %v203
    %337 = vmatpush1.bf16.msra.mxu0 %v202
    %338 = vmatprep.subr.bf16.mxu0 %v199
    %339 = vmatpush1.bf16.msra.mxu0 %v198
    %340 = vmatprep.subr.bf16.mxu0 %v195
    %341 = vmatpush1.bf16.msra.mxu0 %v194
    %342 = vmatprep.subr.bf16.mxu0 %v191
    %343 = vmatpush1.bf16.msra.mxu0 %v190
    %344 = vmatprep.subr.bf16.mxu0 %v187
    %345 = vmatpush1.bf16.msra.mxu0 %v186
    %346 = vmatprep.subr.bf16.mxu0 %v183
    %347 = vmatpush1.bf16.msra.mxu0 %v182
    %348 = vmatprep.subr.bf16.mxu0 0
    %349 = vmatpush2.bf16.msra.mxu0 0
    %350 = vmatprep.subr.bf16.mxu0 0
    %351 = vmatpush2.bf16.msra.mxu0 0
    %352 = vmatprep.subr.bf16.mxu0 0
    %353 = vmatpush2.bf16.msra.mxu0 0
    %354 = vmatprep.subr.bf16.mxu0 0
    %355 = vmatpush2.bf16.msra.mxu0 0
    %356 = vmatprep.subr.bf16.mxu0 0
    %357 = vmatpush2.bf16.msra.mxu0 0
    %358 = vmatprep.subr.bf16.mxu0 0
    %359 = vmatpush2.bf16.msra.mxu0 0
    %360 = vmatprep.subr.bf16.mxu0 0
    %361 = vmatpush2.bf16.msra.mxu0 0
    %362 = vmatprep.subr.bf16.mxu0 0
    %363 = vmatpush2.bf16.msra.mxu0 0
    %364 = vmatprep.mubr.bf16.mxu0 0
    %365 = vmatmul.mubr.bf16.gmra.mxu0 %v75
    %v366 = vpop.f32.mrf.mxu0
    %v367 = vadd.f32 %v281, %v366
    %v368 = vpop.f32.mrf.mxu0
    %v369 = vadd.f32 %v283, %v368
    %v370 = vpop.f32.mrf.mxu0
    %v371 = vadd.f32 %v285, %v370
    %v372 = vpop.f32.mrf.mxu0
    %v373 = vadd.f32 %v287, %v372
    %374 = vdwg.mxu0
    %375 = vmatprep.subr.bf16.mxu0 %v213
    %376 = vmatpush1.bf16.msra.mxu0 %v212
    %377 = vmatprep.subr.bf16.mxu0 %v209
    %378 = vmatpush1.bf16.msra.mxu0 %v208
    %379 = vmatprep.subr.bf16.mxu0 %v205
    %380 = vmatpush1.bf16.msra.mxu0 %v204
    %381 = vmatprep.subr.bf16.mxu0 %v201
    %382 = vmatpush1.bf16.msra.mxu0 %v200
    %383 = vmatprep.subr.bf16.mxu0 %v197
    %384 = vmatpush1.bf16.msra.mxu0 %v196
    %385 = vmatprep.subr.bf16.mxu0 %v193
    %386 = vmatpush1.bf16.msra.mxu0 %v192
    %387 = vmatprep.subr.bf16.mxu0 %v189
    %388 = vmatpush1.bf16.msra.mxu0 %v188
    %389 = vmatprep.subr.bf16.mxu0 %v185
    %390 = vmatpush1.bf16.msra.mxu0 %v184
    %391 = vmatprep.subr.bf16.mxu0 0
    %392 = vmatpush2.bf16.msra.mxu0 0
    %393 = vmatprep.subr.bf16.mxu0 0
    %394 = vmatpush2.bf16.msra.mxu0 0
    %395 = vmatprep.subr.bf16.mxu0 0
    %396 = vmatpush2.bf16.msra.mxu0 0
    %397 = vmatprep.subr.bf16.mxu0 0
    %398 = vmatpush2.bf16.msra.mxu0 0
    %399 = vmatprep.subr.bf16.mxu0 0
    %400 = vmatpush2.bf16.msra.mxu0 0
    %401 = vmatprep.subr.bf16.mxu0 0
    %402 = vmatpush2.bf16.msra.mxu0 0
    %403 = vmatprep.subr.bf16.mxu0 0
    %404 = vmatpush2.bf16.msra.mxu0 0
    %405 = vmatprep.subr.bf16.mxu0 0
    %406 = vmatpush2.bf16.msra.mxu0 0
    %407 = vmatprep.mubr.bf16.mxu0 0
    %408 = vmatmul.mubr.bf16.gmra.mxu0 %v75
    %v409 = vpop.f32.mrf.mxu0
    %v410 = vadd.f32 %v324, %v409
    %v411 = vpop.f32.mrf.mxu0
    %v412 = vadd.f32 %v326, %v411
    %v413 = vpop.f32.mrf.mxu0
    %v414 = vadd.f32 %v328, %v413
    %v415 = vpop.f32.mrf.mxu0
    %v416 = vadd.f32 %v330, %v415
    %417 = vdwg.mxu0
    %418 = vmatprep.subr.bf16.mxu0 %v211
    %419 = vmatpush1.bf16.msra.mxu0 %v210
    %420 = vmatprep.subr.bf16.mxu0 %v207
    %421 = vmatpush1.bf16.msra.mxu0 %v206
    %422 = vmatprep.subr.bf16.mxu0 %v203
    %423 = vmatpush1.bf16.msra.mxu0 %v202
    %424 = vmatprep.subr.bf16.mxu0 %v199
    %425 = vmatpush1.bf16.msra.mxu0 %v198
    %426 = vmatprep.subr.bf16.mxu0 %v195
    %427 = vmatpush1.bf16.msra.mxu0 %v194
    %428 = vmatprep.subr.bf16.mxu0 %v191
    %429 = vmatpush1.bf16.msra.mxu0 %v190
    %430 = vmatprep.subr.bf16.mxu0 %v187
    %431 = vmatpush1.bf16.msra.mxu0 %v186
    %432 = vmatprep.subr.bf16.mxu0 %v183
    %433 = vmatpush1.bf16.msra.mxu0 %v182
    %434 = vmatprep.subr.bf16.mxu0 0
    %435 = vmatpush2.bf16.msra.mxu0 0
    %436 = vmatprep.subr.bf16.mxu0 0
    %437 = vmatpush2.bf16.msra.mxu0 0
    %438 = vmatprep.subr.bf16.mxu0 0
    %439 = vmatpush2.bf16.msra.mxu0 0
    %440 = vmatprep.subr.bf16.mxu0 0
    %441 = vmatpush2.bf16.msra.mxu0 0
    %442 = vmatprep.subr.bf16.mxu0 0
    %443 = vmatpush2.bf16.msra.mxu0 0
    %444 = vmatprep.subr.bf16.mxu0 0
    %445 = vmatpush2.bf16.msra.mxu0 0
    %446 = vmatprep.subr.bf16.mxu0 0
    %447 = vmatpush2.bf16.msra.mxu0 0
    %448 = vmatprep.subr.bf16.mxu0 0
    %449 = vmatpush2.bf16.msra.mxu0 0
    %450 = vmatprep.mubr.bf16.mxu0 0
    %451 = vmatmul.mubr.bf16.gmra.mxu0 %v85
    %v452 = vpop.f32.mrf.mxu0
    %v453 = vadd.f32 0.0, %v452
    %v454 = vpop.f32.mrf.mxu0
    %v455 = vadd.f32 0.0, %v454
    %v456 = vpop.f32.mrf.mxu0
    %v457 = vadd.f32 0.0, %v456
    %v458 = vpop.f32.mrf.mxu0
    %v459 = vadd.f32 0.0, %v458
    %460 = vdwg.mxu0
    %461 = vmatprep.subr.bf16.mxu0 %v213
    %462 = vmatpush1.bf16.msra.mxu0 %v212
    %463 = vmatprep.subr.bf16.mxu0 %v209
    %464 = vmatpush1.bf16.msra.mxu0 %v208
    %465 = vmatprep.subr.bf16.mxu0 %v205
    %466 = vmatpush1.bf16.msra.mxu0 %v204
    %467 = vmatprep.subr.bf16.mxu0 %v201
    %468 = vmatpush1.bf16.msra.mxu0 %v200
    %469 = vmatprep.subr.bf16.mxu0 %v197
    %470 = vmatpush1.bf16.msra.mxu0 %v196
    %471 = vmatprep.subr.bf16.mxu0 %v193
    %472 = vmatpush1.bf16.msra.mxu0 %v192
    %473 = vmatprep.subr.bf16.mxu0 %v189
    %474 = vmatpush1.bf16.msra.mxu0 %v188
    %475 = vmatprep.subr.bf16.mxu0 %v185
    %476 = vmatpush1.bf16.msra.mxu0 %v184
    %477 = vmatprep.subr.bf16.mxu0 0
    %478 = vmatpush2.bf16.msra.mxu0 0
    %479 = vmatprep.subr.bf16.mxu0 0
    %480 = vmatpush2.bf16.msra.mxu0 0
    %481 = vmatprep.subr.bf16.mxu0 0
    %482 = vmatpush2.bf16.msra.mxu0 0
    %483 = vmatprep.subr.bf16.mxu0 0
    %484 = vmatpush2.bf16.msra.mxu0 0
    %485 = vmatprep.subr.bf16.mxu0 0
    %486 = vmatpush2.bf16.msra.mxu0 0
    %487 = vmatprep.subr.bf16.mxu0 0
    %488 = vmatpush2.bf16.msra.mxu0 0
    %489 = vmatprep.subr.bf16.mxu0 0
    %490 = vmatpush2.bf16.msra.mxu0 0
    %491 = vmatprep.subr.bf16.mxu0 0
    %492 = vmatpush2.bf16.msra.mxu0 0
    %493 = vmatprep.mubr.bf16.mxu0 0
    %494 = vmatmul.mubr.bf16.gmra.mxu0 %v85
    %v495 = vpop.f32.mrf.mxu0
    %v496 = vadd.f32 0.0, %v495
    %v497 = vpop.f32.mrf.mxu0
    %v498 = vadd.f32 0.0, %v497
    %v499 = vpop.f32.mrf.mxu0
    %v500 = vadd.f32 0.0, %v499
    %v501 = vpop.f32.mrf.mxu0
    %v502 = vadd.f32 0.0, %v501
    %503 = vdwg.mxu0
    %v504 = vadd.f32 %v367, %v453
    %v505 = vadd.f32 %v369, %v455
    %v506 = vadd.f32 %v410, %v496
    %v507 = vadd.f32 %v412, %v498
    %v508 = vadd.f32 %v371, %v457
    %v509 = vadd.f32 %v373, %v459
    %v510 = vadd.f32 %v414, %v500
    %v511 = vadd.f32 %v416, %v502
    %512 = vst [vmem:[#allocation7] sm:$0xff] %v504
    %513 = vst [vmem:[#allocation7 + $0x8] sm:$0xff] %v505
    %514 = vst [vmem:[#allocation7 + $0x10] sm:$0xff] %v506
    %515 = vst [vmem:[#allocation7 + $0x18] sm:$0xff] %v507
    %516 = vst [vmem:[#allocation7 + $0x20] sm:$0xff] %v508
    %517 = vst [vmem:[#allocation7 + $0x28] sm:$0xff] %v509
    %518 = vst [vmem:[#allocation7 + $0x30] sm:$0xff] %v510
    %519 = vst [vmem:[#allocation7 + $0x38] sm:$0xff] %v511
    // Predicated region
    $region18: #{tpu_custom_call.1} parent=1 // pred_check
      _
    $region19: #{tpu_custom_call.1} parent=1 // pred_check_branch
      %521 = sbr.rel (0) target = $region21
    $region20: #{tpu_custom_call.1} parent=1 // pred_region
      %s523 = ssub.s32 1024, 1024
      %524 = vsyncadd [#allocation4], %s523
      %s525 = sshll.u32 [#allocation7], 4
      %s526 = int_to_ptr.vmem [resolvable:$true] %s525
      %531 = dma.vmem_to_hbm [thread:$0]  %s526, 1024, %s2, [#allocation4], 512, 512, 32
    $region21: #{tpu_custom_call.1} parent=1 // pred_fallthru
      _
    // Predicated region
    $region22: #{tpu_custom_call.1} parent=1 // pred_check
      _
    $region23: #{tpu_custom_call.1} parent=1 // pred_check_branch
      %533 = sbr.rel (0) target = $region25
    $region24: #{tpu_custom_call.1} parent=1 // pred_region
      %534 = dma.done [#allocation4], 1024
    $region25: #{tpu_custom_call.1} parent=1 // pred_fallthru
      _
    %535 = vsyncpa [#allocation3], 1
    %536 = vsyncpa [#allocation6], 1
    %537 = vsyncpa [#allocation4], 1

</llo_original>
